<compile_context>
chip_gen: v7x
topology: tpu7x:2x2x1
jax: 0.10.0
libtpu: 0.0.40
codegen_flags: <defaults>
</compile_context>

<pallas_src>
import functools

import jax
import jax.numpy as jnp
from jax.experimental import pallas as pl
from jax.experimental.pallas import tpu as pltpu


def _softmax_last(x):
    m = jnp.max(x, axis=-1, keepdims=True)
    e = jnp.exp(x - m)
    return e * pl.reciprocal(jnp.sum(e, axis=-1, keepdims=True), approx=True)


def _dot_nt(a, b):
    # a @ b.T (contract the last dim of both operands), f32 accumulation on the MXU.
    return jax.lax.dot_general(
        a, b, (((a.ndim - 1,), (b.ndim - 1,)), ((), ())),
        preferred_element_type=jnp.float32)


# ---------------------------------------------------------------------------
# Stage 1: caption-independent image self-attention (hoisted out of the grid).
# ---------------------------------------------------------------------------
def _image_ctx_kernel(images_ref, new_img_ref, nsq_ref, *, smooth):
    imgs = images_ref[...]                                    # (TB, R, D) f32
    imgs_bf = imgs.astype(jnp.bfloat16)
    logits = jnp.einsum('bqd,bkd->bqk', imgs_bf, imgs_bf,
                        preferred_element_type=jnp.float32) * smooth
    attn = _softmax_last(logits)
    new_img = jnp.einsum('bqk,bkd->bqd', attn.astype(jnp.bfloat16), imgs_bf,
                         preferred_element_type=jnp.float32)
    new_img_ref[...] = new_img.astype(new_img_ref.dtype)      # bf16 out
    nsq_ref[...] = jnp.sum(imgs * imgs, axis=-1)              # ||img||^2, f32


def _pick_batch_tile(n, max_tile=32):
    if n <= max_tile:
        return n
    for tb in range(max_tile, 7, -1):
        if tb % 8 == 0 and n % tb == 0:
            return tb
    return n


def _precompute_image_ctx(images, smooth):
    B, R, D = images.shape
    tb = _pick_batch_tile(B)
    kernel = functools.partial(_image_ctx_kernel, smooth=float(smooth))
    return pl.pallas_call(
        kernel,
        out_shape=(jax.ShapeDtypeStruct((B, R, D), jnp.bfloat16),
                   jax.ShapeDtypeStruct((B, R), jnp.float32)),
        grid_spec=pltpu.PrefetchScalarGridSpec(
            num_scalar_prefetch=0,
            grid=(B // tb,),
            in_specs=[pl.BlockSpec((tb, R, D), lambda i: (i, 0, 0))],
            out_specs=[pl.BlockSpec((tb, R, D), lambda i: (i, 0, 0)),
                       pl.BlockSpec((tb, R), lambda i: (i, 0))],
        ),
        compiler_params=pltpu.CompilerParams(dimension_semantics=("parallel",)),
    )(images)


# ---------------------------------------------------------------------------
# Stage 2: per caption-tile cross-modal attention + cosine similarities.
# ---------------------------------------------------------------------------
def _single_block_kernel(cap_lens_ref, images_ref, new_img_ref, img_nsq_ref,
                         cap_ref, out_ref, *, smooth, tc):
    t = pl.program_id(0)
    imgs = images_ref[...]                                    # (B, R, D) f32
    new_img = new_img_ref[...]                                # (B, R, D) bf16
    img_nsq = img_nsq_ref[...]                                # (B, R)    f32
    B, R, D = imgs.shape
    W = cap_ref.shape[1]
    new_img_flat = new_img.reshape(B * R, D)                  # leading-dim collapse (cheap)
    iota_w = jax.lax.broadcasted_iota(jnp.int32, (1, W), 1)   # small (1, W) mask source
    smooth = jnp.float32(smooth)
    NEG = jnp.float32(-1e30)
    EPS_SQ = jnp.float32(1e-16)                               # (1e-8 clamp)**2
    inv_R = jnp.float32(1.0 / R)

    for c in range(tc):                                       # static unroll over the caption tile
        n_word = jnp.maximum(cap_lens_ref[t * tc + c], 1)     # clamp guards len==0 padding
        word_mask = iota_w < n_word                           # (1, W), broadcast where needed

        cap = cap_ref[c]                                      # (W, D) f32
        cap_bf = cap.astype(jnp.bfloat16)

        # ---- word-word self-attention (keys masked to the true length) ----
        l_cc = _dot_nt(cap_bf, cap_bf) * smooth               # (W, W)
        l_cc = jnp.where(word_mask, l_cc, NEG)
        new_cap = jnp.dot(_softmax_last(l_cc).astype(jnp.bfloat16), cap_bf,
                          preferred_element_type=jnp.float32)  # (W, D) f32
        new_cap_bf = new_cap.astype(jnp.bfloat16)

        # ---- shared cross-modal logits: one flattened (B*R, W) MXU matmul ----
        s = _dot_nt(new_img_flat, new_cap_bf) * smooth        # (B*R, W) f32

        # ---- regions attend words -> weighted_cap, sim1 ----
        attn_rw = _softmax_last(jnp.where(word_mask, s, NEG))  # (B*R, W)
        weighted_cap = jnp.dot(attn_rw.astype(jnp.bfloat16), new_cap_bf,
                               preferred_element_type=jnp.float32).reshape(B, R, D)
        w12 = jnp.sum(imgs * weighted_cap, axis=-1)            # (B, R)
        w2sq = jnp.sum(weighted_cap * weighted_cap, axis=-1)   # (B, R)
        cos1 = w12 * jax.lax.rsqrt(jnp.maximum(img_nsq * w2sq, EPS_SQ))
        sim1 = jnp.sum(cos1, axis=-1) * inv_R                  # (B,)

        # ---- words attend regions -> weighted_img, sim2 (masked word mean) ----
        l_wr = jnp.swapaxes(s.reshape(B, R, W), 1, 2)          # (B, W, R)
        attn_wr = _softmax_last(l_wr)
        weighted_img = jnp.einsum('bwr,brd->bwd', attn_wr.astype(jnp.bfloat16),
                                  new_img, preferred_element_type=jnp.float32)
        c12 = jnp.sum(cap[None, :, :] * weighted_img, axis=-1)  # (B, W)
        c1sq = jnp.sum(cap * cap, axis=-1)[None, :]             # (1, W)
        c2sq = jnp.sum(weighted_img * weighted_img, axis=-1)    # (B, W)
        cos2 = c12 * jax.lax.rsqrt(jnp.maximum(c1sq * c2sq, EPS_SQ))
        cos2 = jnp.where(word_mask, cos2, 0.0)
        sim2 = jnp.sum(cos2, axis=-1) / n_word.astype(jnp.float32)  # (B,)

        out_ref[c, :] = sim1 + sim2


def single_block_pallas(images, captions, cap_lens, smooth, *, caption_tile=8):
    images = images.astype(jnp.float32)
    captions = captions.astype(jnp.float32)
    cap_lens = cap_lens.astype(jnp.int32)
    n_image, n_regions, d = images.shape
    n_caption, max_words, _ = captions.shape

    tc = caption_tile                                          # multiple of 8
    n_cap_pad = int(pl.cdiv(n_caption, tc)) * tc
    pad = n_cap_pad - n_caption
    if pad:
        captions = jnp.pad(captions, ((0, pad), (0, 0), (0, 0)))
        cap_lens = jnp.pad(cap_lens, (0, pad), constant_values=1)

    # Caption-independent work: computed once, not once per caption.
    new_img, img_nsq = _precompute_image_ctx(images, smooth)

    kernel = functools.partial(_single_block_kernel, smooth=float(smooth), tc=tc)
    out = pl.pallas_call(
        kernel,
        out_shape=jax.ShapeDtypeStruct((n_cap_pad, n_image), jnp.float32),
        grid_spec=pltpu.PrefetchScalarGridSpec(
            num_scalar_prefetch=1,
            grid=(n_cap_pad // tc,),
            in_specs=[
                pl.BlockSpec((n_image, n_regions, d), lambda t, lens: (0, 0, 0)),
                pl.BlockSpec((n_image, n_regions, d), lambda t, lens: (0, 0, 0)),
                pl.BlockSpec((n_image, n_regions), lambda t, lens: (0, 0)),
                pl.BlockSpec((tc, max_words, d), lambda t, lens: (t, 0, 0)),
            ],
            out_specs=pl.BlockSpec((tc, n_image), lambda t, lens: (t, 0)),
        ),
        compiler_params=pltpu.CompilerParams(dimension_semantics=("parallel",)),
    )(cap_lens, images, new_img, img_nsq, captions)
    # (n_cap_pad, n_image) -> (n_image, n_caption), matching torch.cat(similarities, 1)
    return out[:n_caption, :].T


# ---------------------------------------------------------------------------
# Pure-JAX reference (PyTorch forward, agg_func='Mean'), mirroring the kernel's
# MXU precision (bf16 operands, f32 accumulation) so the comparison stays tight.
# ---------------------------------------------------------------------------
def reference(images, captions, cap_lens_py, smooth):
    bf16, f32 = jnp.bfloat16, jnp.float32
    eps = 1e-8
    sm = lambda x, ax=-1: jax.nn.softmax(x, axis=ax)

    imgs_bf = images.astype(bf16)
    attn_ii = sm(jnp.einsum('bqd,bkd->bqk', imgs_bf, imgs_bf,
                            preferred_element_type=f32) * smooth)
    new_img = jnp.einsum('bqk,bkd->bqd', attn_ii.astype(bf16), imgs_bf,
                         preferred_element_type=f32)
    new_img_bf = new_img.astype(bf16)
    w1 = jnp.sqrt(jnp.sum(images * images, axis=-1))            # (B, R)

    cols = []
    for i in range(captions.shape[0]):
        nw = max(int(cap_lens_py[i]), 1)
        cap = captions[i, :nw, :]                                # (nw, d)
        cap_bf = cap.astype(bf16)
        l_cc = jnp.einsum('wd,vd->wv', cap_bf, cap_bf,
                          preferred_element_type=f32) * smooth
        new_cap = jnp.dot(sm(l_cc).astype(bf16), cap_bf,
                          preferred_element_type=f32)
        new_cap_bf = new_cap.astype(bf16)

        s = jnp.einsum('brd,wd->brw', new_img_bf, new_cap_bf,
                       preferred_element_type=f32) * smooth      # (B, R, nw)

        attn_rw = sm(s, -1)                                      # over words
        weighted_cap = jnp.einsum('brw,wd->brd', attn_rw.astype(bf16), new_cap_bf,
                                  preferred_element_type=f32)
        w12 = jnp.sum(images * weighted_cap, axis=-1)
        w2 = jnp.sqrt(jnp.sum(weighted_cap * weighted_cap, axis=-1))
        sim1 = jnp.mean(w12 / jnp.maximum(w1 * w2, eps), axis=-1)

        attn_wr = sm(s, 1)                                       # over regions
        weighted_img = jnp.einsum('brw,brd->bwd', attn_wr.astype(bf16), new_img_bf,
                                  preferred_element_type=f32)
        c12 = jnp.sum(cap[None, :, :] * weighted_img, axis=-1)
        c1 = jnp.sqrt(jnp.sum(cap * cap, axis=-1))[None, :]
        c2 = jnp.sqrt(jnp.sum(weighted_img * weighted_img, axis=-1))
        sim2 = jnp.mean(c12 / jnp.maximum(c1 * c2, eps), axis=-1)

        cols.append((sim1 + sim2)[:, None])
    return jnp.concatenate(cols, axis=1)


if __name__ == "__main__":
    key = jax.random.PRNGKey(0)
    n_image, n_regions, d = 4, 8, 32
    n_caption, max_words = 3, 8
    k1, k2 = jax.random.split(key)
    images = jax.random.normal(k1, (n_image, n_regions, d), jnp.float32)
    captions = jax.random.normal(k2, (n_caption, max_words, d), jnp.float32)
    cap_lens_py = [8, 5, 7]
    cap_lens = jnp.array(cap_lens_py, jnp.int32)
    lambda_softmax = 4.0  # opt.lambda_softmax

    out = single_block_pallas(images, captions, cap_lens, lambda_softmax)
    out = jax.block_until_ready(out)

    ref = reference(images, captions, cap_lens_py, lambda_softmax)
    assert out.shape == (n_image, n_caption), out.shape
    # bf16 MXU operands + approx-reciprocal softmax in the kernel vs the exact-divide
    # reference -> modest tolerance (structural bugs would show up as >> 1e-1 errors).
    assert jnp.allclose(out, ref, atol=2e-2, rtol=2e-2), (out, ref)
    print("KERNEL_OK")
</pallas_src>

<mosaic_0001>
module attributes {stable_mosaic.version = 11 : i64} {
  func.func @_image_ctx_kernel(%arg0: i32, %arg1: memref<4x8x32xf32, #tpu.memory_space<vmem>>, %arg2: memref<4x8x32xbf16, #tpu.memory_space<vmem>>, %arg3: memref<4x8xf32, #tpu.memory_space<vmem>>) attributes {dimension_semantics = [#tpu.dimension_semantics<parallel>], iteration_bounds = array<i64: 1>, scalar_prefetch = 0 : i64, scratch_operands = 0 : i64, tpu.core_type = #tpu.core_type<tc>, window_params = [{transform_indices = @transform_0, window_bounds = array<i64: 4, 8, 32>}, {transform_indices = @transform_1, window_bounds = array<i64: 4, 8, 32>}, {transform_indices = @transform_2, window_bounds = array<i64: 4, 8>}]} {
    %c0 = arith.constant 0 : index
    %c0_0 = arith.constant 0 : index
    %c0_1 = arith.constant 0 : index
    %0 = vector.load %arg1[%c0, %c0_0, %c0_1] : memref<4x8x32xf32, #tpu.memory_space<vmem>>, vector<4x8x32xf32>
    %1 = arith.truncf %0 : vector<4x8x32xf32> to vector<4x8x32xbf16>
    "tpu.trace_start"() <{level = 10 : i32, message = "bqd,bkd->bqk"}> : () -> ()
    %cst = arith.constant dense<0.000000e+00> : vector<4x8x8xf32>
    %2 = tpu.matmul %1, %1, %cst {dimension_numbers = #tpu.dot_dimension_numbers<[2], [2], [1], [1], [0, 0, 0, 1, 1, 1], [0], [0]>} : vector<4x8x32xbf16>, vector<4x8x32xbf16>, vector<4x8x8xf32> -> vector<4x8x8xf32>
    "tpu.trace_stop"() : () -> ()
    %cst_2 = arith.constant 4.000000e+00 : f32
    %3 = vector.broadcast %cst_2 : f32 to vector<4x8x8xf32>
    %4 = arith.mulf %2, %3 : vector<4x8x8xf32>
    %cst_3 = arith.constant dense<0xFF800000> : vector<4x8xf32>
    %5 = vector.multi_reduction <maximumf>, %4, %cst_3 [2] : vector<4x8x8xf32> to vector<4x8xf32>
    %6 = vector.shape_cast %5 : vector<4x8xf32> to vector<4x8x1xf32>
    %7 = vector.broadcast %6 : vector<4x8x1xf32> to vector<4x8x8xf32>
    %8 = arith.subf %4, %7 : vector<4x8x8xf32>
    %9 = math.exp %8 : vector<4x8x8xf32>
    %cst_4 = arith.constant dense<0.000000e+00> : vector<4x8xf32>
    %10 = vector.multi_reduction <add>, %9, %cst_4 [2] : vector<4x8x8xf32> to vector<4x8xf32>
    %11 = vector.shape_cast %10 : vector<4x8xf32> to vector<4x8x1xf32>
    %12 = tpu.reciprocal %11 {approx = true} : vector<4x8x1xf32> -> vector<4x8x1xf32>
    %13 = vector.broadcast %12 : vector<4x8x1xf32> to vector<4x8x8xf32>
    %14 = arith.mulf %9, %13 : vector<4x8x8xf32>
    %15 = arith.truncf %14 : vector<4x8x8xf32> to vector<4x8x8xbf16>
    "tpu.trace_start"() <{level = 10 : i32, message = "bqk,bkd->bqd"}> : () -> ()
    %cst_5 = arith.constant dense<0.000000e+00> : vector<4x8x32xf32>
    %16 = tpu.matmul %15, %1, %cst_5 {dimension_numbers = #tpu.dot_dimension_numbers<[2], [1], [1], [2], [0, 0, 0, 1, 1, 2], [0], [0]>} : vector<4x8x8xbf16>, vector<4x8x32xbf16>, vector<4x8x32xf32> -> vector<4x8x32xf32>
    "tpu.trace_stop"() : () -> ()
    %17 = arith.truncf %16 : vector<4x8x32xf32> to vector<4x8x32xbf16>
    %c0_6 = arith.constant 0 : index
    %c0_7 = arith.constant 0 : index
    %c0_8 = arith.constant 0 : index
    %18 = vector.load %arg2[%c0_6, %c0_7, %c0_8] : memref<4x8x32xbf16, #tpu.memory_space<vmem>>, vector<4x8x32xbf16>
    tpu.vector_store %arg2[%c0_6, %c0_7, %c0_8], %17 {strides = array<i32>} : memref<4x8x32xbf16, #tpu.memory_space<vmem>>, vector<4x8x32xbf16>,
    %19 = arith.mulf %0, %0 : vector<4x8x32xf32>
    %cst_9 = arith.constant dense<0.000000e+00> : vector<4x8xf32>
    %20 = vector.multi_reduction <add>, %19, %cst_9 [2] : vector<4x8x32xf32> to vector<4x8xf32>
    %c0_10 = arith.constant 0 : index
    %c0_11 = arith.constant 0 : index
    %21 = vector.load %arg3[%c0_10, %c0_11] : memref<4x8xf32, #tpu.memory_space<vmem>>, vector<4x8xf32>
    tpu.vector_store %arg3[%c0_10, %c0_11], %20 {strides = array<i32>} : memref<4x8xf32, #tpu.memory_space<vmem>>, vector<4x8xf32>,
    return
  }
  func.func @transform_0(%arg0: i32) -> (i32, i32, i32) {
    %c0_i32 = arith.constant 0 : i32
    %c0_i32_0 = arith.constant 0 : i32
    %c0_i32_1 = arith.constant 0 : i32
    return %arg0, %c0_i32, %c0_i32_0 : i32, i32, i32
  }
  func.func @transform_1(%arg0: i32) -> (i32, i32, i32) {
    %c0_i32 = arith.constant 0 : i32
    %c0_i32_0 = arith.constant 0 : i32
    %c0_i32_1 = arith.constant 0 : i32
    return %arg0, %c0_i32, %c0_i32_0 : i32, i32, i32
  }
  func.func @transform_2(%arg0: i32) -> (i32, i32) {
    %c0_i32 = arith.constant 0 : i32
    %c0_i32_0 = arith.constant 0 : i32
    return %arg0, %c0_i32 : i32, i32
  }
}

</mosaic_0001>

<llo_original>
// kernel: tpu_custom_call.1
$region0: #{tpu_custom_call.1}
  #allocation0 [shape = 'u32[]', space=smem, size = 0x4, offset = 0x4, fixed_abs, tag = 'smem constant byte address 0x4 - core index']
  #allocation1 [shape = 'u32[144,128]{1,0:T(1,128)}', space=vmem, size = 0x12000, scoped, tag = 'internal scratch']
  %s0 = inlined_call_operand.hbm [shape: f32[4,8,32], index: 0, kind: input, shape index: {}]
  %s1 = inlined_call_operand.hbm [shape: bf16[4,8,32], index: 1, kind: output, shape index: {0}]
  %s2 = inlined_call_operand.hbm [shape: f32[4,8], index: 2, kind: output, shape index: {1}]
  %3 = xla_tuple %s1, %s2
  %s4 = sld [smem:[#allocation0]]
  $region26: #{tpu_custom_call.1} parent=0
    _
  %s6 = ssub.s32 1, %s4
  %s7 = scalar_select 0, %s6, %s4
  $region1: #{tpu_custom_call.1} parent=0
    #allocation2 [shape = 'u8[16384]{0}', space=vmem, size = 0x4000, scoped, tag = 'input window, operand 0, single buffered']
    #allocation3 [shape = 's32[1]{0}', space=sflag, size = 0x4, scoped, tag = 'scoped memory for tpu_custom_call.1']
    #allocation4 [shape = 's32[1]{0}', space=sflag, size = 0x4, scoped, tag = 'scoped memory for tpu_custom_call.1']
    #allocation5 [shape = 'u8[8192]{0}', space=vmem, size = 0x2000, scoped, tag = 'output window, operand 0, single buffered']
    #allocation6 [shape = 'u8[2048]{0}', space=vmem, size = 0x800, scoped, tag = 'output window, operand 1, single buffered']
    #allocation7 [shape = 's32[1]{0}', space=sflag, size = 0x4, scoped, tag = 'scoped memory for tpu_custom_call.1']
    %8 = vsyncpa [#allocation3], 0
    %9 = vsyncpa [#allocation4], 0
    %10 = vsyncpa [#allocation7], 0
    // Predicated region
    $region2: #{tpu_custom_call.1} parent=1 // pred_check
      _
    $region3: #{tpu_custom_call.1} parent=1 // pred_check_branch
      %12 = sbr.rel (0) target = $region5
    $region4: #{tpu_custom_call.1} parent=1 // pred_region
      %s14 = ssub.s32 512, 512
      %15 = vsyncadd [#allocation3], %s14
      %s16 = sshll.u32 [#allocation2], 4
      %s17 = int_to_ptr.vmem [resolvable:$true] %s16
      %22 = dma.hbm_to_vmem [thread:$0]  %s0, 512, %s17, [#allocation3], 128, 128, 8
    $region5: #{tpu_custom_call.1} parent=1 // pred_fallthru
      _
    // Predicated region
    $region6: #{tpu_custom_call.1} parent=1 // pred_check
      _
    $region7: #{tpu_custom_call.1} parent=1 // pred_check_branch
      %24 = sbr.rel (0) target = $region9
    $region8: #{tpu_custom_call.1} parent=1 // pred_region
      %25 = dma.done [#allocation3], 512
    $region9: #{tpu_custom_call.1} parent=1 // pred_fallthru
      _
    %v27 = vld [vmem:[#allocation2] sm:$0xff]
    %v28 = vld [vmem:[#allocation2 + $0x8] sm:$0xff]
    %v29 = vld [vmem:[#allocation2 + $0x10] sm:$0xff]
    %v30 = vld [vmem:[#allocation2 + $0x18] sm:$0xff]
    %v31 = vpack.c.bf16 %v27, %v27
    %v32 = vpack.c.bf16 %v28, %v28
    %v33 = vpack.c.bf16 %v29, %v29
    %v34 = vpack.c.bf16 %v30, %v30
    %vm35 = vcmask 261120
    %v37 = vsel %vm35, %v31, 0
    %39 = vmatprep.subr.bf16.mxu0 0
    %40 = vmatpush1.bf16.xpose.msra.mxu0 %v37
    %41 = vmatprep.subr.bf16.mxu0 0
    %42 = vmatpush1.bf16.xpose.msra.mxu0 0
    %43 = vmatprep.subr.bf16.mxu0 0
    %44 = vmatpush1.bf16.xpose.msra.mxu0 0
    %45 = vmatprep.subr.bf16.mxu0 0
    %46 = vmatpush1.bf16.xpose.msra.mxu0 0
    %47 = vmatprep.subr.bf16.mxu0 0
    %48 = vmatpush1.bf16.xpose.msra.mxu0 0
    %49 = vmatprep.subr.bf16.mxu0 0
    %50 = vmatpush1.bf16.xpose.msra.mxu0 0
    %51 = vmatprep.subr.bf16.mxu0 0
    %52 = vmatpush1.bf16.xpose.msra.mxu0 0
    %53 = vmatprep.subr.bf16.mxu0 0
    %54 = vmatpush1.bf16.xpose.msra.mxu0 0
    %55 = vmatprep.subr.bf16.mxu0 0
    %56 = vmatpush1.bf16.xpose.msra.mxu0 0
    %57 = vmatprep.subr.bf16.mxu0 0
    %58 = vmatpush1.bf16.xpose.msra.mxu0 0
    %59 = vmatprep.subr.bf16.mxu0 0
    %60 = vmatpush1.bf16.xpose.msra.mxu0 0
    %61 = vmatprep.subr.bf16.mxu0 0
    %62 = vmatpush1.bf16.xpose.msra.mxu0 0
    %63 = vmatprep.subr.bf16.mxu0 0
    %64 = vmatpush1.bf16.xpose.msra.mxu0 0
    %65 = vmatprep.subr.bf16.mxu0 0
    %66 = vmatpush1.bf16.xpose.msra.mxu0 0
    %67 = vmatprep.subr.bf16.mxu0 0
    %68 = vmatpush1.bf16.xpose.msra.mxu0 0
    %69 = vmatprep.subr.bf16.mxu0 0
    %70 = vmatpush1.bf16.xpose.msra.mxu0 0
    %71 = vmatprep.mubr.bf16.mxu0 0
    %72 = vmatmul.mubr.bf16.gmra.mrb[0].mxu0 %v37
    %v73 = vpop.f32.mrb[0].mxu0
    %v74 = vadd.f32 0.0, %v73
    %v75 = vpop.f32.mrb[0].mxu0
    %v76 = vpop.f32.mrb[0].mxu0
    %v77 = vpop.f32.mrb[0].mxu0
    %78 = vdwg.mxu0
    %v80 = vsel %vm35, %v32, 0
    %82 = vmatprep.subr.bf16.mxu0 0
    %83 = vmatpush1.bf16.xpose.msra.mxu0 %v80
    %84 = vmatprep.subr.bf16.mxu0 0
    %85 = vmatpush1.bf16.xpose.msra.mxu0 0
    %86 = vmatprep.subr.bf16.mxu0 0
    %87 = vmatpush1.bf16.xpose.msra.mxu0 0
    %88 = vmatprep.subr.bf16.mxu0 0
    %89 = vmatpush1.bf16.xpose.msra.mxu0 0
    %90 = vmatprep.subr.bf16.mxu0 0
    %91 = vmatpush1.bf16.xpose.msra.mxu0 0
    %92 = vmatprep.subr.bf16.mxu0 0
    %93 = vmatpush1.bf16.xpose.msra.mxu0 0
    %94 = vmatprep.subr.bf16.mxu0 0
    %95 = vmatpush1.bf16.xpose.msra.mxu0 0
    %96 = vmatprep.subr.bf16.mxu0 0
    %97 = vmatpush1.bf16.xpose.msra.mxu0 0
    %98 = vmatprep.subr.bf16.mxu0 0
    %99 = vmatpush1.bf16.xpose.msra.mxu0 0
    %100 = vmatprep.subr.bf16.mxu0 0
    %101 = vmatpush1.bf16.xpose.msra.mxu0 0
    %102 = vmatprep.subr.bf16.mxu0 0
    %103 = vmatpush1.bf16.xpose.msra.mxu0 0
    %104 = vmatprep.subr.bf16.mxu0 0
    %105 = vmatpush1.bf16.xpose.msra.mxu0 0
    %106 = vmatprep.subr.bf16.mxu0 0
    %107 = vmatpush1.bf16.xpose.msra.mxu0 0
    %108 = vmatprep.subr.bf16.mxu0 0
    %109 = vmatpush1.bf16.xpose.msra.mxu0 0
    %110 = vmatprep.subr.bf16.mxu0 0
    %111 = vmatpush1.bf16.xpose.msra.mxu0 0
    %112 = vmatprep.subr.bf16.mxu0 0
    %113 = vmatpush1.bf16.xpose.msra.mxu0 0
    %114 = vmatprep.mubr.bf16.mxu0 0
    %115 = vmatmul.mubr.bf16.gmra.mrb[0].mxu0 %v80
    %v116 = vpop.f32.mrb[0].mxu0
    %v117 = vadd.f32 0.0, %v116
    %v118 = vpop.f32.mrb[0].mxu0
    %v119 = vpop.f32.mrb[0].mxu0
    %v120 = vpop.f32.mrb[0].mxu0
    %121 = vdwg.mxu0
    %v123 = vsel %vm35, %v33, 0
    %125 = vmatprep.subr.bf16.mxu0 0
    %126 = vmatpush1.bf16.xpose.msra.mxu0 %v123
    %127 = vmatprep.subr.bf16.mxu0 0
    %128 = vmatpush1.bf16.xpose.msra.mxu0 0
    %129 = vmatprep.subr.bf16.mxu0 0
    %130 = vmatpush1.bf16.xpose.msra.mxu0 0
    %131 = vmatprep.subr.bf16.mxu0 0
    %132 = vmatpush1.bf16.xpose.msra.mxu0 0
    %133 = vmatprep.subr.bf16.mxu0 0
    %134 = vmatpush1.bf16.xpose.msra.mxu0 0
    %135 = vmatprep.subr.bf16.mxu0 0
    %136 = vmatpush1.bf16.xpose.msra.mxu0 0
    %137 = vmatprep.subr.bf16.mxu0 0
    %138 = vmatpush1.bf16.xpose.msra.mxu0 0
    %139 = vmatprep.subr.bf16.mxu0 0
    %140 = vmatpush1.bf16.xpose.msra.mxu0 0
    %141 = vmatprep.subr.bf16.mxu0 0
    %142 = vmatpush1.bf16.xpose.msra.mxu0 0
    %143 = vmatprep.subr.bf16.mxu0 0
    %144 = vmatpush1.bf16.xpose.msra.mxu0 0
    %145 = vmatprep.subr.bf16.mxu0 0
    %146 = vmatpush1.bf16.xpose.msra.mxu0 0
    %147 = vmatprep.subr.bf16.mxu0 0
    %148 = vmatpush1.bf16.xpose.msra.mxu0 0
    %149 = vmatprep.subr.bf16.mxu0 0
    %150 = vmatpush1.bf16.xpose.msra.mxu0 0
    %151 = vmatprep.subr.bf16.mxu0 0
    %152 = vmatpush1.bf16.xpose.msra.mxu0 0
    %153 = vmatprep.subr.bf16.mxu0 0
    %154 = vmatpush1.bf16.xpose.msra.mxu0 0
    %155 = vmatprep.subr.bf16.mxu0 0
    %156 = vmatpush1.bf16.xpose.msra.mxu0 0
    %157 = vmatprep.mubr.bf16.mxu0 0
    %158 = vmatmul.mubr.bf16.gmra.mrb[0].mxu0 %v123
    %v159 = vpop.f32.mrb[0].mxu0
    %v160 = vadd.f32 0.0, %v159
    %v161 = vpop.f32.mrb[0].mxu0
    %v162 = vpop.f32.mrb[0].mxu0
    %v163 = vpop.f32.mrb[0].mxu0
    %164 = vdwg.mxu0
    %v166 = vsel %vm35, %v34, 0
    %168 = vmatprep.subr.bf16.mxu0 0
    %169 = vmatpush1.bf16.xpose.msra.mxu0 %v166
    %170 = vmatprep.subr.bf16.mxu0 0
    %171 = vmatpush1.bf16.xpose.msra.mxu0 0
    %172 = vmatprep.subr.bf16.mxu0 0
    %173 = vmatpush1.bf16.xpose.msra.mxu0 0
    %174 = vmatprep.subr.bf16.mxu0 0
    %175 = vmatpush1.bf16.xpose.msra.mxu0 0
    %176 = vmatprep.subr.bf16.mxu0 0
    %177 = vmatpush1.bf16.xpose.msra.mxu0 0
    %178 = vmatprep.subr.bf16.mxu0 0
    %179 = vmatpush1.bf16.xpose.msra.mxu0 0
    %180 = vmatprep.subr.bf16.mxu0 0
    %181 = vmatpush1.bf16.xpose.msra.mxu0 0
    %182 = vmatprep.subr.bf16.mxu0 0
    %183 = vmatpush1.bf16.xpose.msra.mxu0 0
    %184 = vmatprep.subr.bf16.mxu0 0
    %185 = vmatpush1.bf16.xpose.msra.mxu0 0
    %186 = vmatprep.subr.bf16.mxu0 0
    %187 = vmatpush1.bf16.xpose.msra.mxu0 0
    %188 = vmatprep.subr.bf16.mxu0 0
    %189 = vmatpush1.bf16.xpose.msra.mxu0 0
    %190 = vmatprep.subr.bf16.mxu0 0
    %191 = vmatpush1.bf16.xpose.msra.mxu0 0
    %192 = vmatprep.subr.bf16.mxu0 0
    %193 = vmatpush1.bf16.xpose.msra.mxu0 0
    %194 = vmatprep.subr.bf16.mxu0 0
    %195 = vmatpush1.bf16.xpose.msra.mxu0 0
    %196 = vmatprep.subr.bf16.mxu0 0
    %197 = vmatpush1.bf16.xpose.msra.mxu0 0
    %198 = vmatprep.subr.bf16.mxu0 0
    %199 = vmatpush1.bf16.xpose.msra.mxu0 0
    %200 = vmatprep.mubr.bf16.mxu0 0
    %201 = vmatmul.mubr.bf16.gmra.mrb[0].mxu0 %v166
    %v202 = vpop.f32.mrb[0].mxu0
    %v203 = vadd.f32 0.0, %v202
    %v204 = vpop.f32.mrb[0].mxu0
    %v205 = vpop.f32.mrb[0].mxu0
    %v206 = vpop.f32.mrb[0].mxu0
    %207 = vdwg.mxu0
    %v208 = vmul.f32 %v74, 4.0
    %v209 = vmul.f32 %v117, 4.0
    %v210 = vmul.f32 %v160, 4.0
    %v211 = vmul.f32 %v203, 4.0
    %vm212 = vcmask 64512
    %v213 = vsel %vm212, %v208, -inf
    %214 = vmax.xlane.f32.xlu0 %v213
    %v215 = vpop.xlane.xlu0 %214
    %v216 = vsel %vm212, %v209, -inf
    %217 = vmax.xlane.f32.xlu0 %v216
    %v218 = vpop.xlane.xlu0 %217
    %v219 = vsel %vm212, %v210, -inf
    %220 = vmax.xlane.f32.xlu0 %v219
    %v221 = vpop.xlane.xlu0 %220
    %v222 = vsel %vm212, %v211, -inf
    %223 = vmax.xlane.f32.xlu0 %v222
    %v224 = vpop.xlane.xlu0 %223
    %v225 = vsub.f32 %v208, %v215
    %v226 = vsub.f32 %v209, %v218
    %v227 = vsub.f32 %v210, %v221
    %v228 = vsub.f32 %v211, %v224
    %v229 = vmul.f32 %v225, 1.442695
    %v230 = vpow.pop %v229
    %v231 = vmul.f32 %v226, 1.442695
    %v232 = vpow.pop %v231
    %v233 = vmul.f32 %v227, 1.442695
    %v234 = vpow.pop %v233
    %v235 = vmul.f32 %v228, 1.442695
    %v236 = vpow.pop %v235
    %v237 = vsel %vm212, %v230, 0.0
    %238 = vadd.xlane.f32.xlu0 %v237
    %v239 = vpop.xlane.xlu0 %238
    %v240 = vsel %vm212, %v232, 0.0
    %241 = vadd.xlane.f32.xlu0 %v240
    %v242 = vpop.xlane.xlu0 %241
    %v243 = vsel %vm212, %v234, 0.0
    %244 = vadd.xlane.f32.xlu0 %v243
    %v245 = vpop.xlane.xlu0 %244
    %v246 = vsel %vm212, %v236, 0.0
    %247 = vadd.xlane.f32.xlu0 %v246
    %v248 = vpop.xlane.xlu0 %247
    %v249 = vrcp.pop %v239
    %v250 = vrcp.pop %v242
    %v251 = vrcp.pop %v245
    %v252 = vrcp.pop %v248
    %v253 = vmul.f32 %v230, %v249
    %v254 = vmul.f32 %v232, %v250
    %v255 = vmul.f32 %v234, %v251
    %v256 = vmul.f32 %v236, %v252
    %v257 = vpack.c.bf16 %v253, %v253
    %v258 = vpack.c.bf16 %v254, %v254
    %v259 = vpack.c.bf16 %v255, %v255
    %v260 = vpack.c.bf16 %v256, %v256
    %v262 = vsel %vm212, %v257, 0
    %vm264 = vcmask 1043456
    %v265 = vsel %vm264, %v31, 0
    %267 = vmatprep.subr.bf16.mxu0 0
    %268 = vmatpush1.bf16.msra.mxu0 %v265
    %269 = vmatprep.subr.bf16.mxu0 0
    %270 = vmatpush1.bf16.msra.mxu0 0
    %271 = vmatprep.subr.bf16.mxu0 0
    %272 = vmatpush1.bf16.msra.mxu0 0
    %273 = vmatprep.subr.bf16.mxu0 0
    %274 = vmatpush1.bf16.msra.mxu0 0
    %275 = vmatprep.subr.bf16.mxu0 0
    %276 = vmatpush1.bf16.msra.mxu0 0
    %277 = vmatprep.subr.bf16.mxu0 0
    %278 = vmatpush1.bf16.msra.mxu0 0
    %279 = vmatprep.subr.bf16.mxu0 0
    %280 = vmatpush1.bf16.msra.mxu0 0
    %281 = vmatprep.subr.bf16.mxu0 0
    %282 = vmatpush1.bf16.msra.mxu0 0
    %283 = vmatprep.subr.bf16.mxu0 0
    %284 = vmatpush1.bf16.msra.mxu0 0
    %285 = vmatprep.subr.bf16.mxu0 0
    %286 = vmatpush1.bf16.msra.mxu0 0
    %287 = vmatprep.subr.bf16.mxu0 0
    %288 = vmatpush1.bf16.msra.mxu0 0
    %289 = vmatprep.subr.bf16.mxu0 0
    %290 = vmatpush1.bf16.msra.mxu0 0
    %291 = vmatprep.subr.bf16.mxu0 0
    %292 = vmatpush1.bf16.msra.mxu0 0
    %293 = vmatprep.subr.bf16.mxu0 0
    %294 = vmatpush1.bf16.msra.mxu0 0
    %295 = vmatprep.subr.bf16.mxu0 0
    %296 = vmatpush1.bf16.msra.mxu0 0
    %297 = vmatprep.subr.bf16.mxu0 0
    %298 = vmatpush1.bf16.msra.mxu0 0
    %299 = vmatprep.mubr.bf16.mxu0 0
    %300 = vmatmul.mubr.bf16.gmra.mrb[0].mxu0 %v262
    %v301 = vpop.f32.mrb[0].mxu0
    %v302 = vadd.f32 0.0, %v301
    %v303 = vpop.f32.mrb[0].mxu0
    %v304 = vpop.f32.mrb[0].mxu0
    %v305 = vpop.f32.mrb[0].mxu0
    %306 = vdwg.mxu0
    %v308 = vsel %vm212, %v258, 0
    %v310 = vsel %vm264, %v32, 0
    %312 = vmatprep.subr.bf16.mxu0 0
    %313 = vmatpush1.bf16.msra.mxu0 %v310
    %314 = vmatprep.subr.bf16.mxu0 0
    %315 = vmatpush1.bf16.msra.mxu0 0
    %316 = vmatprep.subr.bf16.mxu0 0
    %317 = vmatpush1.bf16.msra.mxu0 0
    %318 = vmatprep.subr.bf16.mxu0 0
    %319 = vmatpush1.bf16.msra.mxu0 0
    %320 = vmatprep.subr.bf16.mxu0 0
    %321 = vmatpush1.bf16.msra.mxu0 0
    %322 = vmatprep.subr.bf16.mxu0 0
    %323 = vmatpush1.bf16.msra.mxu0 0
    %324 = vmatprep.subr.bf16.mxu0 0
    %325 = vmatpush1.bf16.msra.mxu0 0
    %326 = vmatprep.subr.bf16.mxu0 0
    %327 = vmatpush1.bf16.msra.mxu0 0
    %328 = vmatprep.subr.bf16.mxu0 0
    %329 = vmatpush1.bf16.msra.mxu0 0
    %330 = vmatprep.subr.bf16.mxu0 0
    %331 = vmatpush1.bf16.msra.mxu0 0
    %332 = vmatprep.subr.bf16.mxu0 0
    %333 = vmatpush1.bf16.msra.mxu0 0
    %334 = vmatprep.subr.bf16.mxu0 0
    %335 = vmatpush1.bf16.msra.mxu0 0
    %336 = vmatprep.subr.bf16.mxu0 0
    %337 = vmatpush1.bf16.msra.mxu0 0
    %338 = vmatprep.subr.bf16.mxu0 0
    %339 = vmatpush1.bf16.msra.mxu0 0
    %340 = vmatprep.subr.bf16.mxu0 0
    %341 = vmatpush1.bf16.msra.mxu0 0
    %342 = vmatprep.subr.bf16.mxu0 0
    %343 = vmatpush1.bf16.msra.mxu0 0
    %344 = vmatprep.mubr.bf16.mxu0 0
    %345 = vmatmul.mubr.bf16.gmra.mrb[0].mxu0 %v308
    %v346 = vpop.f32.mrb[0].mxu0
    %v347 = vadd.f32 0.0, %v346
    %v348 = vpop.f32.mrb[0].mxu0
    %v349 = vpop.f32.mrb[0].mxu0
    %v350 = vpop.f32.mrb[0].mxu0
    %351 = vdwg.mxu0
    %v353 = vsel %vm212, %v259, 0
    %v355 = vsel %vm264, %v33, 0
    %357 = vmatprep.subr.bf16.mxu0 0
    %358 = vmatpush1.bf16.msra.mxu0 %v355
    %359 = vmatprep.subr.bf16.mxu0 0
    %360 = vmatpush1.bf16.msra.mxu0 0
    %361 = vmatprep.subr.bf16.mxu0 0
    %362 = vmatpush1.bf16.msra.mxu0 0
    %363 = vmatprep.subr.bf16.mxu0 0
    %364 = vmatpush1.bf16.msra.mxu0 0
    %365 = vmatprep.subr.bf16.mxu0 0
    %366 = vmatpush1.bf16.msra.mxu0 0
    %367 = vmatprep.subr.bf16.mxu0 0
    %368 = vmatpush1.bf16.msra.mxu0 0
    %369 = vmatprep.subr.bf16.mxu0 0
    %370 = vmatpush1.bf16.msra.mxu0 0
    %371 = vmatprep.subr.bf16.mxu0 0
    %372 = vmatpush1.bf16.msra.mxu0 0
    %373 = vmatprep.subr.bf16.mxu0 0
    %374 = vmatpush1.bf16.msra.mxu0 0
    %375 = vmatprep.subr.bf16.mxu0 0
    %376 = vmatpush1.bf16.msra.mxu0 0
    %377 = vmatprep.subr.bf16.mxu0 0
    %378 = vmatpush1.bf16.msra.mxu0 0
    %379 = vmatprep.subr.bf16.mxu0 0
    %380 = vmatpush1.bf16.msra.mxu0 0
    %381 = vmatprep.subr.bf16.mxu0 0
    %382 = vmatpush1.bf16.msra.mxu0 0
    %383 = vmatprep.subr.bf16.mxu0 0
    %384 = vmatpush1.bf16.msra.mxu0 0
    %385 = vmatprep.subr.bf16.mxu0 0
    %386 = vmatpush1.bf16.msra.mxu0 0
    %387 = vmatprep.subr.bf16.mxu0 0
    %388 = vmatpush1.bf16.msra.mxu0 0
    %389 = vmatprep.mubr.bf16.mxu0 0
    %390 = vmatmul.mubr.bf16.gmra.mrb[0].mxu0 %v353
    %v391 = vpop.f32.mrb[0].mxu0
    %v392 = vadd.f32 0.0, %v391
    %v393 = vpop.f32.mrb[0].mxu0
    %v394 = vpop.f32.mrb[0].mxu0
    %v395 = vpop.f32.mrb[0].mxu0
    %396 = vdwg.mxu0
    %v398 = vsel %vm212, %v260, 0
    %v400 = vsel %vm264, %v34, 0
    %402 = vmatprep.subr.bf16.mxu0 0
    %403 = vmatpush1.bf16.msra.mxu0 %v400
    %404 = vmatprep.subr.bf16.mxu0 0
    %405 = vmatpush1.bf16.msra.mxu0 0
    %406 = vmatprep.subr.bf16.mxu0 0
    %407 = vmatpush1.bf16.msra.mxu0 0
    %408 = vmatprep.subr.bf16.mxu0 0
    %409 = vmatpush1.bf16.msra.mxu0 0
    %410 = vmatprep.subr.bf16.mxu0 0
    %411 = vmatpush1.bf16.msra.mxu0 0
    %412 = vmatprep.subr.bf16.mxu0 0
    %413 = vmatpush1.bf16.msra.mxu0 0
    %414 = vmatprep.subr.bf16.mxu0 0
    %415 = vmatpush1.bf16.msra.mxu0 0
    %416 = vmatprep.subr.bf16.mxu0 0
    %417 = vmatpush1.bf16.msra.mxu0 0
    %418 = vmatprep.subr.bf16.mxu0 0
    %419 = vmatpush1.bf16.msra.mxu0 0
    %420 = vmatprep.subr.bf16.mxu0 0
    %421 = vmatpush1.bf16.msra.mxu0 0
    %422 = vmatprep.subr.bf16.mxu0 0
    %423 = vmatpush1.bf16.msra.mxu0 0
    %424 = vmatprep.subr.bf16.mxu0 0
    %425 = vmatpush1.bf16.msra.mxu0 0
    %426 = vmatprep.subr.bf16.mxu0 0
    %427 = vmatpush1.bf16.msra.mxu0 0
    %428 = vmatprep.subr.bf16.mxu0 0
    %429 = vmatpush1.bf16.msra.mxu0 0
    %430 = vmatprep.subr.bf16.mxu0 0
    %431 = vmatpush1.bf16.msra.mxu0 0
    %432 = vmatprep.subr.bf16.mxu0 0
    %433 = vmatpush1.bf16.msra.mxu0 0
    %434 = vmatprep.mubr.bf16.mxu0 0
    %435 = vmatmul.mubr.bf16.gmra.mrb[0].mxu0 %v398
    %v436 = vpop.f32.mrb[0].mxu0
    %v437 = vadd.f32 0.0, %v436
    %v438 = vpop.f32.mrb[0].mxu0
    %v439 = vpop.f32.mrb[0].mxu0
    %v440 = vpop.f32.mrb[0].mxu0
    %441 = vdwg.mxu0
    %v442 = vpack.c.bf16 %v302, %v302
    %v443 = vpack.c.bf16 %v347, %v347
    %v444 = vpack.c.bf16 %v392, %v392
    %v445 = vpack.c.bf16 %v437, %v437
    %vm446 = vcmask 257024
    %447 = vst.msk [vmem:[#allocation5] sm:$0xf] %vm446, %v442
    %448 = vst.msk [vmem:[#allocation5 + $0x4] sm:$0xf] %vm446, %v443
    %449 = vst.msk [vmem:[#allocation5 + $0x8] sm:$0xf] %vm446, %v444
    %450 = vst.msk [vmem:[#allocation5 + $0xc] sm:$0xf] %vm446, %v445
    %v451 = vmul.f32 %v27, %v27
    %v452 = vmul.f32 %v28, %v28
    %v453 = vmul.f32 %v29, %v29
    %v454 = vmul.f32 %v30, %v30
    %v455 = vsel %vm35, %v451, 0.0
    %456 = vadd.xlane.f32.xlu0 %v455
    %v457 = vpop.xlane.xlu0 %456
    %v458 = vsel %vm35, %v452, 0.0
    %459 = vadd.xlane.f32.xlu0 %v458
    %v460 = vpop.xlane.xlu0 %459
    %v461 = vsel %vm35, %v453, 0.0
    %462 = vadd.xlane.f32.xlu0 %v461
    %v463 = vpop.xlane.xlu0 %462
    %v464 = vsel %vm35, %v454, 0.0
    %465 = vadd.xlane.f32.xlu0 %v464
    %v466 = vpop.xlane.xlu0 %465
    %v471 = vlaneseq
    %v472 = vand.u32 %v471, 127
    %v473 = vlaneseq
    %v474 = vshrl.u32 %v473, 7
    %v475 = vsub.s32 %v472, %v474
    %v476 = vrot.slane %v457, %v475
    %v477 = vlaneseq
    %v478 = vshrl.u32 %v477, 7
    %v479 = vsub.s32 %v472, %v478
    %v480 = vrot.slane %v460, %v479
    %v481 = vlaneseq
    %v482 = vshrl.u32 %v481, 7
    %v483 = vsub.s32 %v472, %v482
    %v484 = vrot.slane %v463, %v483
    %v485 = vlaneseq
    %v486 = vshrl.u32 %v485, 7
    %v487 = vsub.s32 %v472, %v486
    %v488 = vrot.slane %v466, %v487
    %vm489 = vcmask 1041409
    %v490 = vsel %vm489, %v480, %v476
    %vm491 = vcmask 1042434
    %v492 = vsel %vm491, %v484, %v490
    %vm493 = vcmask 1043459
    %v494 = vsel %vm493, %v488, %v492
    %vm496 = vcmask 60416
    %497 = vst.msk [vmem:[#allocation6] sm:$0xf] %vm496, %v494
    // Predicated region
    $region10: #{tpu_custom_call.1} parent=1 // pred_check
      _
    $region11: #{tpu_custom_call.1} parent=1 // pred_check_branch
      %499 = sbr.rel (0) target = $region13
    $region12: #{tpu_custom_call.1} parent=1 // pred_region
      %s501 = ssub.s32 256, 256
      %502 = vsyncadd [#allocation4], %s501
      %s503 = sshll.u32 [#allocation5], 4
      %s504 = int_to_ptr.vmem [resolvable:$true] %s503
      %509 = dma.vmem_to_hbm [thread:$0]  %s504, 256, %s1, [#allocation4], 64, 64, 4
    $region13: #{tpu_custom_call.1} parent=1 // pred_fallthru
      _
    // Predicated region
    $region14: #{tpu_custom_call.1} parent=1 // pred_check
      _
    $region15: #{tpu_custom_call.1} parent=1 // pred_check_branch
      %511 = sbr.rel (0) target = $region17
    $region16: #{tpu_custom_call.1} parent=1 // pred_region
      %s513 = ssub.s32 64, 64
      %514 = vsyncadd [#allocation7], %s513
      %s516 = sshll.u32 [#allocation6], 4
      %s517 = int_to_ptr.vmem [resolvable:$true] %s516
      %519 = dma.vmem_to_hbm [thread:$0]  %s517, 64, %s2, [#allocation7]
    $region17: #{tpu_custom_call.1} parent=1 // pred_fallthru
      _
    // Predicated region
    $region18: #{tpu_custom_call.1} parent=1 // pred_check
      _
    $region19: #{tpu_custom_call.1} parent=1 // pred_check_branch
      %521 = sbr.rel (0) target = $region21
    $region20: #{tpu_custom_call.1} parent=1 // pred_region
      %522 = dma.done [#allocation4], 256
    $region21: #{tpu_custom_call.1} parent=1 // pred_fallthru
      _
    // Predicated region
    $region22: #{tpu_custom_call.1} parent=1 // pred_check
      _
    $region23: #{tpu_custom_call.1} parent=1 // pred_check_branch
      %524 = sbr.rel (0) target = $region25
    $region24: #{tpu_custom_call.1} parent=1 // pred_region
      %525 = dma.done [#allocation7], 64
    $region25: #{tpu_custom_call.1} parent=1 // pred_fallthru
      _
    %526 = vsyncpa [#allocation3], 1
    %527 = vsyncpa [#allocation4], 1
    %528 = vsyncpa [#allocation7], 1

</llo_original>
